<compile_context>
chip_gen: v5e
topology: v5e:2x2
jax: 0.10.0
libtpu: 0.0.40
codegen_flags: <defaults>
</compile_context>

<pallas_src>
import functools

import jax
import jax.numpy as jnp
from jax.experimental import pallas as pl
from jax.experimental.pallas import tpu as pltpu


def _round_up(x, m):
    return ((x + m - 1) // m) * m


def _slab_offsets(S, L):
    """Row offsets of the sub-blocks inside the packed parameter slab."""
    r_w2 = _round_up(S, 8)                 # W2 starts here
    r_wh = r_w2 + _round_up(L, 8)          # [Wm^T ; Ws^T] starts here (2 rows)
    r_b = r_wh + 8                         # bias rows start here (4 rows)
    rows = r_b + 8                         # total rows (multiple of 8)
    return r_w2, r_wh, r_b, rows


def _make_actor_kernel(S, L, r_w2, r_wh, r_b):
    def kernel(x_ref, p_ref, out_ref):
        """One batch tile of the fused 2-layer MLP + fused (mean|stddev) head.

        x_ref:  (TILE_B, S) f32 activations
        p_ref:  (rows, L)   f32 packed parameter slab (resident across the grid)
        out_ref:(2, TILE_B) f32 — row 0 = mean, row 1 = clamped stddev
        """
        x = x_ref[...]                                   # (TILE_B, S)

        # Static slices of the resident slab (8-aligned starts -> free views).
        w1 = p_ref[0:S, :]                               # (S, L)
        w2 = p_ref[r_w2:r_w2 + L, :]                     # (L, L)
        wh_t = p_ref[r_wh:r_wh + 2, :]                   # (2, L): row0=Wm^T, row1=Ws^T
        b1 = p_ref[r_b:r_b + 1, :]                       # (1, L)
        b2 = p_ref[r_b + 1:r_b + 2, :]                   # (1, L)
        bh = p_ref[r_b + 2:r_b + 4, 0:1]                 # (2, 1): [bm ; bs]

        # Layer 1 + 2: MXU matmuls with f32 accumulation, bias + ReLU on VPU.
        h1 = jnp.maximum(
            jnp.dot(x, w1, preferred_element_type=jnp.float32) + b1, 0.0)
        h2 = jnp.maximum(
            jnp.dot(h1, w2, preferred_element_type=jnp.float32) + b2, 0.0)

        # Fused heads, computed already transposed so the store is lane-dense:
        # (2, L) @ (L, TILE_B) -> (2, TILE_B). h2.T rides the otherwise-idle XLU.
        heads_t = jnp.dot(wh_t, h2.T, preferred_element_type=jnp.float32) + bh

        mean_row = heads_t[0:1, :]
        std_row = jnp.clip(heads_t[1:2, :], 1e-6, 1.0)
        out_ref[...] = jnp.concatenate([mean_row, std_row], axis=0)

    return kernel


def pack_params(params):
    """Pack the 8 Linear tensors into one resident f32 slab of shape (rows, L).

    Layout (every sub-block starts at a multiple-of-8 row):
      rows [0, S)          : W1                       (S, L)
      rows [r_w2, r_w2+L)  : W2                       (L, L)
      rows [r_wh, r_wh+2)  : [Wm^T ; Ws^T]            (2, L)
      rows [r_b,  r_b+4)   : b1 ; b2 ; [bm,0..] ; [bs,0..]
    """
    w1, b1, w2, b2, wm, bm, ws, bs = params
    S, L = w1.shape
    r_w2, r_wh, r_b, rows = _slab_offsets(S, L)

    slab = jnp.zeros((rows, L), jnp.float32)
    slab = slab.at[0:S, :].set(w1.astype(jnp.float32))
    slab = slab.at[r_w2:r_w2 + L, :].set(w2.astype(jnp.float32))
    slab = slab.at[r_wh, :].set(wm[:, 0].astype(jnp.float32))
    slab = slab.at[r_wh + 1, :].set(ws[:, 0].astype(jnp.float32))
    slab = slab.at[r_b, :].set(b1[0].astype(jnp.float32))
    slab = slab.at[r_b + 1, :].set(b2[0].astype(jnp.float32))
    slab = slab.at[r_b + 2, 0].set(bm[0, 0].astype(jnp.float32))
    slab = slab.at[r_b + 3, 0].set(bs[0, 0].astype(jnp.float32))
    return slab


@functools.partial(jax.jit, static_argnames=("max_tile_b",))
def actor_forward(state, slab, *, max_tile_b=2048):
    """state: [B, state_dim] f32; slab from pack_params.

    Returns (mean [B,1], stddev [B,1]) f32, matching ActorNetwork.forward."""
    B, S = state.shape
    L = slab.shape[1]
    rows = slab.shape[0]
    r_w2, r_wh, r_b, _ = _slab_offsets(S, L)

    # Batch tiling. (8,128) block rules:
    #   state block (TILE_B, S): TILE_B on the sublane axis -> multiple of 8.
    #   out block   (2, TILE_B): TILE_B on the lane axis    -> multiple of 128,
    #                            unless the grid has a single tile (block == full dim).
    # Target >= 2 tiles for large B so ("parallel",) can use both v7x TensorCores.
    tile = max(8, min(max_tile_b, _round_up(pl.cdiv(B, 2), 8)))
    if tile >= B:
        TILE_B = _round_up(B, 8)                 # single tile covers the batch
    else:
        TILE_B = _round_up(tile, 128)            # lane axis of transposed output
        if TILE_B >= B:                          # rounding swallowed the batch
            TILE_B = _round_up(B, 8)
    num_tiles = pl.cdiv(B, TILE_B)
    B_pad = num_tiles * TILE_B
    if B_pad != B:
        state = jnp.pad(state, ((0, B_pad - B), (0, 0)))

    flops = int(2 * B_pad * (S * L + L * L + 2 * L))
    bytes_accessed = int(B_pad * S * 4 + slab.size * 4 + 2 * B_pad * 4)

    kernel = _make_actor_kernel(S, L, r_w2, r_wh, r_b)

    out = pl.pallas_call(
        kernel,
        out_shape=jax.ShapeDtypeStruct((2, B_pad), jnp.float32),
        grid_spec=pltpu.PrefetchScalarGridSpec(
            num_scalar_prefetch=0,
            grid=(num_tiles,),
            in_specs=[
                pl.BlockSpec((TILE_B, S), lambda i: (i, 0)),   # state: tiled over batch
                pl.BlockSpec((rows, L), lambda i: (0, 0)),     # param slab: resident
            ],
            out_specs=pl.BlockSpec((2, TILE_B), lambda i: (0, i)),
        ),
        compiler_params=pltpu.CompilerParams(
            dimension_semantics=("parallel",),
        ),
        cost_estimate=pl.CostEstimate(
            flops=flops, transcendentals=0, bytes_accessed=bytes_accessed),
    )(state, slab)

    mean = out[0, :B][:, None]
    stddev = out[1, :B][:, None]
    return mean, stddev


def init_params(key, state_dim, layers_dim):
    """PyTorch-Linear-style init: U(-1/sqrt(fan_in), 1/sqrt(fan_in)).

    Weights stored [in_features, out_features] so the kernel computes x @ W + b
    (== PyTorch's x @ W.T + b with W of shape [out, in])."""
    ks = jax.random.split(key, 8)

    def linear(kw, kb, fan_in, fan_out):
        bound = 1.0 / jnp.sqrt(jnp.float32(fan_in))
        w = jax.random.uniform(kw, (fan_in, fan_out), jnp.float32, -bound, bound)
        b = jax.random.uniform(kb, (1, fan_out), jnp.float32, -bound, bound)
        return w, b

    w1, b1 = linear(ks[0], ks[1], state_dim, layers_dim)
    w2, b2 = linear(ks[2], ks[3], layers_dim, layers_dim)
    wm, bm = linear(ks[4], ks[5], layers_dim, 1)
    ws, bs = linear(ks[6], ks[7], layers_dim, 1)
    return (w1, b1, w2, b2, wm, bm, ws, bs)


def actor_forward_ref(state, params):
    """Pure-JAX reference for correctness check."""
    w1, b1, w2, b2, wm, bm, ws, bs = params
    h1 = jnp.maximum(state @ w1 + b1, 0.0)
    h2 = jnp.maximum(h1 @ w2 + b2, 0.0)
    mean = h2 @ wm + bm
    std = jnp.clip(h2 @ ws + bs, 1e-6, 1.0)
    return mean, std


if __name__ == "__main__":
    # Small shapes consistent with the module: state_dim=(32,), layers_dim=32.
    batch, state_dim, layers_dim = 8, 32, 32

    key = jax.random.PRNGKey(0)
    k_params, k_state, k_state2 = jax.random.split(key, 3)

    params = init_params(k_params, state_dim, layers_dim)
    slab = pack_params(params)

    # Tiny per-env-step batch (single tile).
    state = jax.random.normal(k_state, (batch, state_dim), jnp.float32)
    mean, std = actor_forward(state, slab)
    jax.block_until_ready((mean, std))
    mean_ref, std_ref = actor_forward_ref(state, params)
    assert mean.shape == (batch, 1) and std.shape == (batch, 1)
    assert jnp.allclose(mean, mean_ref, atol=5e-4, rtol=5e-4)
    assert jnp.allclose(std, std_ref, atol=5e-4, rtol=5e-4)

    # Larger, non-aligned batch: exercises batch padding and a 2-tile grid
    # (lets dimension_semantics=("parallel",) use both TCs on v7x).
    B2 = 300
    state2 = jax.random.normal(k_state2, (B2, state_dim), jnp.float32)
    mean2, std2 = actor_forward(state2, slab)
    jax.block_until_ready((mean2, std2))
    mean2_ref, std2_ref = actor_forward_ref(state2, params)
    assert mean2.shape == (B2, 1) and std2.shape == (B2, 1)
    assert jnp.allclose(mean2, mean2_ref, atol=5e-4, rtol=5e-4)
    assert jnp.allclose(std2, std2_ref, atol=5e-4, rtol=5e-4)

    # TODO(synk): sample_action_logprob (Normal rsample / tanh squash / log_prob)
    # is a stochastic method outside forward(); not implemented in the kernel.

    print("KERNEL_OK")
</pallas_src>

<mosaic_0001>
module attributes {stable_mosaic.version = 11 : i64} {
  func.func @kernel(%arg0: i32, %arg1: memref<8x32xf32, #tpu.memory_space<vmem>>, %arg2: memref<80x32xf32, #tpu.memory_space<vmem>>, %arg3: memref<2x8xf32, #tpu.memory_space<vmem>>) attributes {dimension_semantics = [#tpu.dimension_semantics<parallel>], iteration_bounds = array<i64: 1>, scalar_prefetch = 0 : i64, scratch_operands = 0 : i64, tpu.core_type = #tpu.core_type<tc>, window_params = [{transform_indices = @transform_0, window_bounds = array<i64: 8, 32>}, {pipeline_mode = #tpu.pipeline_mode<synchronous>, transform_indices = @transform_1, window_bounds = array<i64: 80, 32>}, {transform_indices = @transform_2, window_bounds = array<i64: 2, 8>}]} {
    %c0 = arith.constant 0 : index
    %c0_0 = arith.constant 0 : index
    %0 = vector.load %arg1[%c0, %c0_0] : memref<8x32xf32, #tpu.memory_space<vmem>>, vector<8x32xf32>
    %c0_1 = arith.constant 0 : index
    %c0_2 = arith.constant 0 : index
    %1 = vector.load %arg2[%c0_1, %c0_2] : memref<80x32xf32, #tpu.memory_space<vmem>>, vector<32x32xf32>
    %c32 = arith.constant 32 : index
    %c0_3 = arith.constant 0 : index
    %2 = vector.load %arg2[%c32, %c0_3] : memref<80x32xf32, #tpu.memory_space<vmem>>, vector<32x32xf32>
    %c64 = arith.constant 64 : index
    %c0_4 = arith.constant 0 : index
    %3 = vector.load %arg2[%c64, %c0_4] : memref<80x32xf32, #tpu.memory_space<vmem>>, vector<2x32xf32>
    %c72 = arith.constant 72 : index
    %c0_5 = arith.constant 0 : index
    %4 = vector.load %arg2[%c72, %c0_5] : memref<80x32xf32, #tpu.memory_space<vmem>>, vector<1x32xf32>
    %c73 = arith.constant 73 : index
    %c0_6 = arith.constant 0 : index
    %5 = vector.load %arg2[%c73, %c0_6] : memref<80x32xf32, #tpu.memory_space<vmem>>, vector<1x32xf32>
    %c74 = arith.constant 74 : index
    %c0_7 = arith.constant 0 : index
    %6 = vector.load %arg2[%c74, %c0_7] : memref<80x32xf32, #tpu.memory_space<vmem>>, vector<2x1xf32>
    %cst = arith.constant dense<0.000000e+00> : vector<8x32xf32>
    %7 = tpu.matmul %0, %1, %cst {dimension_numbers = #tpu.dot_dimension_numbers<[1], [0], [0], [1], [0, 0, 1, 1], [], []>} : vector<8x32xf32>, vector<32x32xf32>, vector<8x32xf32> -> vector<8x32xf32>
    %8 = vector.broadcast %4 : vector<1x32xf32> to vector<8x32xf32>
    %9 = arith.addf %7, %8 : vector<8x32xf32>
    %cst_8 = arith.constant 0.000000e+00 : f32
    %10 = vector.broadcast %cst_8 : f32 to vector<8x32xf32>
    %11 = arith.maximumf %9, %10 : vector<8x32xf32>
    %cst_9 = arith.constant dense<0.000000e+00> : vector<8x32xf32>
    %12 = tpu.matmul %11, %2, %cst_9 {dimension_numbers = #tpu.dot_dimension_numbers<[1], [0], [0], [1], [0, 0, 1, 1], [], []>} : vector<8x32xf32>, vector<32x32xf32>, vector<8x32xf32> -> vector<8x32xf32>
    %13 = vector.broadcast %5 : vector<1x32xf32> to vector<8x32xf32>
    %14 = arith.addf %12, %13 : vector<8x32xf32>
    %cst_10 = arith.constant 0.000000e+00 : f32
    %15 = vector.broadcast %cst_10 : f32 to vector<8x32xf32>
    %16 = arith.maximumf %14, %15 : vector<8x32xf32>
    %17 = tpu.transpose %16, [1, 0] : vector<8x32xf32> -> vector<32x8xf32>
    %cst_11 = arith.constant dense<0.000000e+00> : vector<2x8xf32>
    %18 = tpu.matmul %3, %17, %cst_11 {dimension_numbers = #tpu.dot_dimension_numbers<[1], [0], [0], [1], [0, 0, 1, 1], [], []>} : vector<2x32xf32>, vector<32x8xf32>, vector<2x8xf32> -> vector<2x8xf32>
    %19 = vector.broadcast %6 : vector<2x1xf32> to vector<2x8xf32>
    %20 = arith.addf %18, %19 : vector<2x8xf32>
    %21 = vector.extract_strided_slice %20 {offsets = [0, 0], sizes = [1, 8], strides = [1, 1]} : vector<2x8xf32> to vector<1x8xf32>
    %22 = vector.extract_strided_slice %20 {offsets = [1, 0], sizes = [1, 8], strides = [1, 1]} : vector<2x8xf32> to vector<1x8xf32>
    %cst_12 = arith.constant 9.99999997E-7 : f32
    %cst_13 = arith.constant 1.000000e+00 : f32
    %23 = vector.broadcast %cst_12 : f32 to vector<1x8xf32>
    %24 = arith.maximumf %23, %22 : vector<1x8xf32>
    %25 = vector.broadcast %cst_13 : f32 to vector<1x8xf32>
    %26 = arith.minimumf %25, %24 : vector<1x8xf32>
    %27 = tpu.concatenate %21, %26 in 0 : vector<1x8xf32>, vector<1x8xf32> -> vector<2x8xf32>
    %c0_14 = arith.constant 0 : index
    %c0_15 = arith.constant 0 : index
    %28 = vector.load %arg3[%c0_14, %c0_15] : memref<2x8xf32, #tpu.memory_space<vmem>>, vector<2x8xf32>
    tpu.vector_store %arg3[%c0_14, %c0_15], %27 {strides = array<i32>} : memref<2x8xf32, #tpu.memory_space<vmem>>, vector<2x8xf32>,
    return
  }
  func.func @transform_0(%arg0: i32) -> (i32, i32) {
    %c0_i32 = arith.constant 0 : i32
    %c0_i32_0 = arith.constant 0 : i32
    return %arg0, %c0_i32 : i32, i32
  }
  func.func @transform_1(%arg0: i32) -> (i32, i32) {
    %c0_i32 = arith.constant 0 : i32
    %c0_i32_0 = arith.constant 0 : i32
    %c0_i32_1 = arith.constant 0 : i32
    return %c0_i32, %c0_i32_0 : i32, i32
  }
  func.func @transform_2(%arg0: i32) -> (i32, i32) {
    %c0_i32 = arith.constant 0 : i32
    %c0_i32_0 = arith.constant 0 : i32
    return %c0_i32, %arg0 : i32, i32
  }
}

</mosaic_0001>

<llo_original>
// kernel: actor_forward.1
$region0: #{actor_forward.1}
  #allocation0 [shape = 'u32[]', space=smem, size = 0x4, offset = 0x4, fixed_abs, tag = 'smem constant byte address 0x4 - core index']
  #allocation1 [shape = 'u32[72,128]{1,0:T(1,128)}', space=vmem, size = 0x9000, scoped, tag = 'internal scratch']
  %s0 = inlined_call_operand.vmem [shape: f32[8,32], index: 0, kind: input, shape index: {}]
  %s1 = inlined_call_operand.vmem [shape: f32[80,32], index: 1, kind: input, shape index: {}]
  %s2 = inlined_call_operand.vmem [shape: f32[2,8], index: 2, kind: output, shape index: {}]
  %s3 = sld [smem:[#allocation0]]
  $region18: #{actor_forward.1} parent=0
    _
  %s5 = ssub.s32 1, %s3
  %s6 = scalar_select 0, %s5, %s3
  // Predicated region
  $region2: #{actor_forward.1} parent=0 // pred_check
    _
  $region3: #{actor_forward.1} parent=0 // pred_check_branch
    %8 = sbr.rel (0) target = $region5
  $region4: #{actor_forward.1} parent=0 // pred_region
    _
  $region5: #{actor_forward.1} parent=0 // pred_fallthru
    _
  // Predicated region
  $region6: #{actor_forward.1} parent=0 // pred_check
    _
  $region7: #{actor_forward.1} parent=0 // pred_check_branch
    %10 = sbr.rel (0) target = $region9
  $region8: #{actor_forward.1} parent=0 // pred_region
    _
  $region9: #{actor_forward.1} parent=0 // pred_fallthru
    _
  %v11 = vld [vmem:[%s0] sm:$0xff]
  %v12 = vld [vmem:[%s1] sm:$0xff]
  %v13 = vld [vmem:[%s1 + $0x8] sm:$0xff]
  %v14 = vld [vmem:[%s1 + $0x10] sm:$0xff]
  %v15 = vld [vmem:[%s1 + $0x18] sm:$0xff]
  %v16 = vld [vmem:[%s1 + $0x20] sm:$0xff]
  %v17 = vld [vmem:[%s1 + $0x28] sm:$0xff]
  %v18 = vld [vmem:[%s1 + $0x30] sm:$0xff]
  %v19 = vld [vmem:[%s1 + $0x38] sm:$0xff]
  %v20 = vld [vmem:[%s1 + $0x40] sm:$0x3]
  %v21 = vld [vmem:[%s1 + $0x48] sm:$0x1]
  %v22 = vld [vmem:[%s1 + $0x49] sm:$0x1]
  %v23 = vld [vmem:[%s1 + $0x4a] sm:$0x3]
  %v24 = vperm.slane %v21, 0
  %vm25 = vcmask 261120
  %v27 = vsel %vm25, %v11, 0
  %29 = vmatpush.msra.mxu0 0.0
  %30 = vmatpush.msra.mxu0 0.0
  %31 = vmatpush.msra.mxu0 0.0
  %32 = vmatpush.msra.mxu0 0.0
  %33 = vmatpush.msra.mxu0 0.0
  %34 = vmatpush.msra.mxu0 0.0
  %35 = vmatpush.msra.mxu0 0.0
  %36 = vmatpush.msra.mxu0 0.0
  %37 = vmatpush.msra.mxu0 0.0
  %38 = vmatpush.msra.mxu0 0.0
  %39 = vmatpush.msra.mxu0 0.0
  %40 = vmatpush.msra.mxu0 0.0
  %41 = vmatpush.msra.mxu0 %v15
  %42 = vmatpush.msra.mxu0 %v14
  %43 = vmatpush.msra.mxu0 %v13
  %44 = vmatpush.msra.mxu0 %v12
  %45 = vmatmul.f32.gmra.mxu0 %v27
  %v46 = vpop.f32.mrf.mxu0
  %v47 = vadd.f32 %v24, %v46
  %48 = vdwg.mxu0
  %v49 = vmax.f32 %v47, 0.0
  %v50 = vperm.slane %v22, 0
  %v52 = vsel %vm25, %v49, 0
  %54 = vmatpush.msra.mxu0 0.0
  %55 = vmatpush.msra.mxu0 0.0
  %56 = vmatpush.msra.mxu0 0.0
  %57 = vmatpush.msra.mxu0 0.0
  %58 = vmatpush.msra.mxu0 0.0
  %59 = vmatpush.msra.mxu0 0.0
  %60 = vmatpush.msra.mxu0 0.0
  %61 = vmatpush.msra.mxu0 0.0
  %62 = vmatpush.msra.mxu0 0.0
  %63 = vmatpush.msra.mxu0 0.0
  %64 = vmatpush.msra.mxu0 0.0
  %65 = vmatpush.msra.mxu0 0.0
  %66 = vmatpush.msra.mxu0 %v19
  %67 = vmatpush.msra.mxu0 %v18
  %68 = vmatpush.msra.mxu0 %v17
  %69 = vmatpush.msra.mxu0 %v16
  %70 = vmatmul.f32.gmra.mxu0 %v52
  %v71 = vpop.f32.mrf.mxu0
  %v72 = vadd.f32 %v50, %v71
  %73 = vdwg.mxu0
  %v74 = vmax.f32 %v72, 0.0
  %76 = vset.pattern.permute.xlu0 0
  %77 = vperm.xlu0 %76, %v23
  %v78 = vpop.permute.xlu0 %77
  %v81 = vsel %vm25, %v20, 0
  %v84 = vsel %vm25, %v74, 0
  %86 = vmatpush.xpose.msra.mxu0 0.0
  %87 = vmatpush.xpose.msra.mxu0 0.0
  %88 = vmatpush.xpose.msra.mxu0 0.0
  %89 = vmatpush.xpose.msra.mxu0 0.0
  %90 = vmatpush.xpose.msra.mxu0 0.0
  %91 = vmatpush.xpose.msra.mxu0 0.0
  %92 = vmatpush.xpose.msra.mxu0 0.0
  %93 = vmatpush.xpose.msra.mxu0 0.0
  %94 = vmatpush.xpose.msra.mxu0 0.0
  %95 = vmatpush.xpose.msra.mxu0 0.0
  %96 = vmatpush.xpose.msra.mxu0 0.0
  %97 = vmatpush.xpose.msra.mxu0 0.0
  %98 = vmatpush.xpose.msra.mxu0 0.0
  %99 = vmatpush.xpose.msra.mxu0 0.0
  %100 = vmatpush.xpose.msra.mxu0 0.0
  %101 = vmatpush.xpose.msra.mxu0 %v84
  %102 = vmatmul.f32.gmra.mxu0 %v81
  %v103 = vpop.f32.mrf.mxu0
  %v104 = vadd.f32 %v78, %v103
  %105 = vdwg.mxu0
  %v106 = vmax.f32 %v104, 1e-06
  %v107 = vmin.f32 %v106, 1.0
  %vm108 = vcmask 1040384
  %v109 = vsel %vm108, %v104, %v107
  %vm110 = vcmask 58368
  %111 = vst.msk [vmem:[%s2] sm:$0x3] %vm110, %v109
  // Predicated region
  $region10: #{actor_forward.1} parent=0 // pred_check
    _
  $region11: #{actor_forward.1} parent=0 // pred_check_branch
    %113 = sbr.rel (0) target = $region13
  $region12: #{actor_forward.1} parent=0 // pred_region
    _
  $region13: #{actor_forward.1} parent=0 // pred_fallthru
    _
  // Predicated region
  $region14: #{actor_forward.1} parent=0 // pred_check
    _
  $region15: #{actor_forward.1} parent=0 // pred_check_branch
    %115 = sbr.rel (0) target = $region17
  $region16: #{actor_forward.1} parent=0 // pred_region
    _
  $region17: #{actor_forward.1} parent=0 // pred_fallthru
    _

</llo_original>
